<compile_context>
chip_gen: v7x
topology: tpu7x:2x2x1
jax: 0.10.0
libtpu: 0.0.40
codegen_flags: <defaults>
</compile_context>

<pallas_src>
import jax
import jax.numpy as jnp
from jax.experimental import pallas as pl
from jax.experimental.pallas import tpu as pltpu


def _round_up(x, m):
    return ((x + m - 1) // m) * m


def _vmem_capacity_bytes():
    """Best-effort query of physical VMEM size; conservative fallback (v7x)."""
    try:
        cap = getattr(pltpu.get_tpu_info(), "vmem_capacity_bytes", None)
        if cap:
            return int(cap)
    except Exception:
        pass
    return 64 * 1024 * 1024  # v7x-safe default


def _select_tiles(O, I, out_itemsize, big_vmem):
    """Pick (tile_o, tile_i) filling the generation-appropriate VMEM budget."""
    lane_cap = 8192 if big_vmem else 4096
    block_budget = (64 if big_vmem else 28) * 1024 * 1024

    # Lane (in_channels) block: full row if it fits; otherwise prefer a
    # 128-multiple that divides I so the last column block is not a masked
    # partial store.
    if I <= lane_cap:
        tile_i = I
    else:
        tile_i = lane_cap
        for cand in range(lane_cap, 127, -128):
            if I % cand == 0:
                tile_i = cand
                break

    # Per-row VMEM cost, double-buffered: uint8 weight in + result out, plus
    # the lane-padded (tile_o, 1) f32 scale & bias blocks (128 lanes * 4 B,
    # two arrays, two buffers each).
    per_row = 2 * tile_i * (1 + out_itemsize) + 2 * 2 * 128 * 4
    tile_o = max(32, (block_budget // per_row) // 32 * 32)
    tile_o = min(tile_o, _round_up(O, 32), 8192)

    go, gi = pl.cdiv(O, tile_o), pl.cdiv(I, tile_i)
    # v7x has 2 TensorCores with independent DMA paths: make sure a parallel
    # axis has >= 2 blocks so both get work (cheap on single-TC chips).
    if go * gi < 2 and O > 32:
        tile_o = _round_up(pl.cdiv(O, 2), 32)
        go = pl.cdiv(O, tile_o)

    return tile_o, tile_i, go, gi


def _dequant_kernel(scale_ref, bias_ref, w_ref, out_ref):
    # scale_ref / bias_ref: (tile_o, 1) f32, block index changes only with the
    # outer grid axis (re-fetched once per row block, not per inner step).
    s = scale_ref[...]
    b = bias_ref[...]
    # uint8 -> f32 is exact; (w - zp) * s == w * s + (-zp * s) in f32.
    w = w_ref[...].astype(s.dtype)
    out_ref[...] = (w * s + b).astype(out_ref.dtype)


def int8_asymmetric_decompress(weight_u8, scale, zero_point_u8, result_dtype=None):
    """Pallas port of INT8AsymmetricWeightsDecompressor.forward
    (return_decompressed_only=True semantics: returns the decompressed weight)."""
    O, I = weight_u8.shape
    compute_dtype = scale.dtype
    scale2d = scale.reshape(O, 1).astype(compute_dtype)
    # Fold zero_point into a precomputed bias on the host: bias = -zp * scale.
    bias2d = (-zero_point_u8.reshape(O, 1).astype(compute_dtype)) * scale2d
    out_dtype = (jnp.dtype(result_dtype) if result_dtype is not None
                 else jnp.dtype(compute_dtype))

    big_vmem = _vmem_capacity_bytes() >= 100 * 1024 * 1024  # v5e/v6e: 128 MiB
    vmem_limit = (100 if big_vmem else 48) * 1024 * 1024

    tile_o, tile_i, go, gi = _select_tiles(O, I, out_dtype.itemsize, big_vmem)

    cost = pl.CostEstimate(
        flops=2 * O * I,
        transcendentals=0,
        bytes_accessed=O * I * (1 + out_dtype.itemsize) + O * 2 * 4,
    )

    return pl.pallas_call(
        _dequant_kernel,
        out_shape=jax.ShapeDtypeStruct((O, I), out_dtype),
        grid_spec=pltpu.PrefetchScalarGridSpec(
            num_scalar_prefetch=0,
            grid=(go, gi),
            in_specs=[
                pl.BlockSpec((tile_o, 1), lambda i, j: (i, 0)),       # scale
                pl.BlockSpec((tile_o, 1), lambda i, j: (i, 0)),       # bias
                pl.BlockSpec((tile_o, tile_i), lambda i, j: (i, j)),  # weight
            ],
            out_specs=pl.BlockSpec((tile_o, tile_i), lambda i, j: (i, j)),
        ),
        compiler_params=pltpu.CompilerParams(
            dimension_semantics=("parallel", "parallel"),
            vmem_limit_bytes=vmem_limit,
        ),
        cost_estimate=cost,
    )(scale2d, bias2d, weight_u8)


if __name__ == "__main__":
    # Small, module-consistent shapes: a Linear-style weight [out=64, in=128].
    O, I = 64, 128
    key = jax.random.PRNGKey(0)
    k_w, k_s, k_z = jax.random.split(key, 3)

    # Compressed weights: uint8 values in [0, 255].
    weight_u8 = jax.random.randint(k_w, (O, I), 0, 256, dtype=jnp.int32).astype(jnp.uint8)
    # Per-output-channel scale (float32), positive.
    scale = jax.random.uniform(k_s, (O, 1), dtype=jnp.float32) * 0.05 + 1e-3
    # Zero point in [0, 255], packed to uint8 (pack_weight in __init__).
    zero_point_u8 = jax.random.randint(k_z, (O, 1), 0, 256, dtype=jnp.int32).astype(jnp.uint8)

    result_dtype = jnp.bfloat16  # plays the role of `result_dtype` in the module

    out = int8_asymmetric_decompress(weight_u8, scale, zero_point_u8,
                                     result_dtype=result_dtype)
    out = jax.block_until_ready(out)

    # Pure-JAX reference for correctness.
    ref = ((weight_u8.astype(jnp.float32) - zero_point_u8.astype(jnp.float32))
           * scale).astype(result_dtype)

    assert out.shape == (O, I) and out.dtype == jnp.dtype(result_dtype)
    assert jnp.allclose(out.astype(jnp.float32), ref.astype(jnp.float32),
                        atol=1e-2, rtol=1e-2)
    print("KERNEL_OK")
</pallas_src>

<mosaic_0001>
module attributes {stable_mosaic.version = 11 : i64} {
  func.func @_dequant_kernel(%arg0: i32, %arg1: i32, %arg2: memref<32x1xf32, #tpu.memory_space<vmem>>, %arg3: memref<32x1xf32, #tpu.memory_space<vmem>>, %arg4: memref<32x128xi8, #tpu.memory_space<vmem>>, %arg5: memref<32x128xbf16, #tpu.memory_space<vmem>>) attributes {dimension_semantics = [#tpu.dimension_semantics<parallel>, #tpu.dimension_semantics<parallel>], iteration_bounds = array<i64: 2, 1>, scalar_prefetch = 0 : i64, scratch_operands = 0 : i64, tpu.core_type = #tpu.core_type<tc>, window_params = [{transform_indices = @transform_0, window_bounds = array<i64: 32, 1>}, {transform_indices = @transform_1, window_bounds = array<i64: 32, 1>}, {transform_indices = @transform_2, window_bounds = array<i64: 32, 128>}, {transform_indices = @transform_3, window_bounds = array<i64: 32, 128>}]} {
    %c0 = arith.constant 0 : index
    %c0_0 = arith.constant 0 : index
    %0 = vector.load %arg2[%c0, %c0_0] : memref<32x1xf32, #tpu.memory_space<vmem>>, vector<32x1xf32>
    %c0_1 = arith.constant 0 : index
    %c0_2 = arith.constant 0 : index
    %1 = vector.load %arg3[%c0_1, %c0_2] : memref<32x1xf32, #tpu.memory_space<vmem>>, vector<32x1xf32>
    %c0_3 = arith.constant 0 : index
    %c0_4 = arith.constant 0 : index
    %2 = vector.load %arg4[%c0_3, %c0_4] : memref<32x128xi8, #tpu.memory_space<vmem>>, vector<32x128xi8>
    %3 = arith.uitofp %2 : vector<32x128xi8> to vector<32x128xf32>
    %4 = vector.broadcast %0 : vector<32x1xf32> to vector<32x128xf32>
    %5 = arith.mulf %3, %4 : vector<32x128xf32>
    %6 = vector.broadcast %1 : vector<32x1xf32> to vector<32x128xf32>
    %7 = arith.addf %5, %6 : vector<32x128xf32>
    %8 = arith.truncf %7 : vector<32x128xf32> to vector<32x128xbf16>
    %c0_5 = arith.constant 0 : index
    %c0_6 = arith.constant 0 : index
    %9 = vector.load %arg5[%c0_5, %c0_6] : memref<32x128xbf16, #tpu.memory_space<vmem>>, vector<32x128xbf16>
    tpu.vector_store %arg5[%c0_5, %c0_6], %8 {strides = array<i32>} : memref<32x128xbf16, #tpu.memory_space<vmem>>, vector<32x128xbf16>,
    return
  }
  func.func @transform_0(%arg0: i32, %arg1: i32) -> (i32, i32) {
    %c0_i32 = arith.constant 0 : i32
    %c0_i32_0 = arith.constant 0 : i32
    return %arg0, %c0_i32 : i32, i32
  }
  func.func @transform_1(%arg0: i32, %arg1: i32) -> (i32, i32) {
    %c0_i32 = arith.constant 0 : i32
    %c0_i32_0 = arith.constant 0 : i32
    return %arg0, %c0_i32 : i32, i32
  }
  func.func @transform_2(%arg0: i32, %arg1: i32) -> (i32, i32) {
    %c0_i32 = arith.constant 0 : i32
    return %arg0, %arg1 : i32, i32
  }
  func.func @transform_3(%arg0: i32, %arg1: i32) -> (i32, i32) {
    %c0_i32 = arith.constant 0 : i32
    return %arg0, %arg1 : i32, i32
  }
}

</mosaic_0001>

<llo_original>
// kernel: tpu_custom_call.1
$region0: #{tpu_custom_call.1}
  #allocation0 [shape = 'u32[]', space=smem, size = 0x4, offset = 0x4, fixed_abs, tag = 'smem constant byte address 0x4 - core index']
  #allocation1 [shape = 'u32[144,128]{1,0:T(1,128)}', space=vmem, size = 0x12000, scoped, tag = 'internal scratch']
  %s0 = inlined_call_operand.vmem [shape: f32[64,1], index: 0, kind: input, shape index: {}]
  %s1 = inlined_call_operand.vmem [shape: f32[64,1], index: 1, kind: input, shape index: {}]
  %s2 = inlined_call_operand.vmem [shape: u8[64,128], index: 2, kind: input, shape index: {}]
  %s3 = inlined_call_operand.hbm [shape: bf16[64,128], index: 3, kind: output, shape index: {}]
  %s4 = sld [smem:[#allocation0]]
  $region45: #{tpu_custom_call.1} parent=0
    _
  %s6 = ssub.s32 1, %s4
  %s7 = scalar_select 0, %s6, %s4
  $region1: #{tpu_custom_call.1} parent=0
    #allocation2 [shape = 'u8[16384]{0}', space=vmem, size = 0x4000, scoped, tag = 'output window, operand 0']
    #allocation3 [shape = 's32[2]{0}', space=sflag, size = 0x8, scoped, tag = 'scoped memory for tpu_custom_call.1']
    %8 = vsyncpa [#allocation3], 0
    %s9 = scalar_lea.sflag [#allocation3], 1
    %10 = vsyncpa %s9, 0
    loop: start=0, step=1, limit=4
    $region2: #{tpu_custom_call.1} parent=1 // loop_pre_header
      _
    $region3: #{tpu_custom_call.1} parent=1 // loop_header
      %s12 = sphi 0, %s16
      %p13 = scmp.ge.s32.totalorder %s12, 4
      %s19 = sphi 0, %s31
      %s20 = sphi 0, %s27
      %s21 = sphi 0, %s19
      %s22 = sphi 0, %s20
      %s23 = sphi 0, %s21
      %s24 = sphi 0, %s22
      %s34 = sphi 0, %s36
      %s37 = sphi 0, %s34
      %s38 = sphi 0, %s37
      %s54 = sphi 0, %s38
      %s60 = sphi 0, %s62
      %s63 = sphi 0, %s60
      %s64 = sphi 0, %s63
      %s80 = sphi 0, %s64
      %s88 = sphi 0, %s90
      %s91 = sphi 0, %s88
      %s92 = sphi 0, %s91
      %s108 = sphi 0, %s92
      %s116 = sphi 0, %s118
      %s119 = sphi 0, %s116
      %s120 = sphi 0, %s119
      %s136 = sphi 0, %s120
    $region4: #{tpu_custom_call.1} parent=1 // loop_header_branch
      %15 = sbr.rel (%p13) target = $region8
    $region5: #{tpu_custom_call.1} parent=1 // loop_body
      %s17 = ssub.s32 %s12, 1
      %s18 = ssub.s32 %s12, 2
      %s25 = sadd.s32 1, %s20
      %p26 = scmp.ge.s32.totalorder %s25, 1
      %s27 = scalar_select %p26, 0, %s25
      %s28 = sadd.s32 1, %s19
      %s29 = scalar_select %p26, %s28, %s19
      %p30 = scmp.ge.s32.totalorder %s29, 2
      %s31 = scalar_select %p30, 0, %s29
      %s32 = ssub.s32 %s19, %s31
      %p33 = scmp.eq.s32.totalorder %s32, 0
      %s35 = sadd.s32 %s34, 1
      %s36 = scalar_select %p33, %s34, %s35
      %p39 = pneg %p33
      %p40 = scmp.eq.s32.totalorder %s12, 1
      %p41 = por %p39, %p40
      %p42 = scmp.ne.s32.totalorder %s34, %s37
      %p43 = scmp.eq.s32.totalorder %s12, 0
      %p44 = por %p42, %p43
      %p45 = scmp.ne.s32.totalorder %s34, %s37
      %p46 = scmp.eq.s32.totalorder %s17, 1
      %p47 = por %p45, %p46
      %p48 = scmp.ne.s32.totalorder %s37, %s38
      %p49 = scmp.eq.s32.totalorder %s17, 0
      %p50 = por %p48, %p49
      %p51 = scmp.ne.s32.totalorder %s37, %s38
      %p52 = scmp.eq.s32.totalorder %s18, 1
      %p53 = por %p51, %p52
      %p55 = scmp.ne.s32.totalorder %s38, %s54
      %p56 = scmp.eq.s32.totalorder %s18, 0
      %p57 = por %p55, %p56
      %s58 = ssub.s32 %s19, %s31
      %p59 = scmp.eq.s32.totalorder %s58, 0
      %s61 = sadd.s32 %s60, 1
      %s62 = scalar_select %p59, %s60, %s61
      %p65 = pneg %p59
      %p66 = scmp.eq.s32.totalorder %s12, 1
      %p67 = por %p65, %p66
      %p68 = scmp.ne.s32.totalorder %s60, %s63
      %p69 = scmp.eq.s32.totalorder %s12, 0
      %p70 = por %p68, %p69
      %p71 = scmp.ne.s32.totalorder %s60, %s63
      %p72 = scmp.eq.s32.totalorder %s17, 1
      %p73 = por %p71, %p72
      %p74 = scmp.ne.s32.totalorder %s63, %s64
      %p75 = scmp.eq.s32.totalorder %s17, 0
      %p76 = por %p74, %p75
      %p77 = scmp.ne.s32.totalorder %s63, %s64
      %p78 = scmp.eq.s32.totalorder %s18, 1
      %p79 = por %p77, %p78
      %p81 = scmp.ne.s32.totalorder %s64, %s80
      %p82 = scmp.eq.s32.totalorder %s18, 0
      %p83 = por %p81, %p82
      %s84 = ssub.s32 %s19, %s31
      %s85 = ssub.s32 %s20, %s27
      %s86 = sor.u32 %s84, %s85
      %p87 = scmp.eq.s32.totalorder %s86, 0
      %s89 = sadd.s32 %s88, 1
      %s90 = scalar_select %p87, %s88, %s89
      %p93 = pneg %p87
      %p94 = scmp.eq.s32.totalorder %s12, 1
      %p95 = por %p93, %p94
      %p96 = scmp.ne.s32.totalorder %s88, %s91
      %p97 = scmp.eq.s32.totalorder %s12, 0
      %p98 = por %p96, %p97
      %p99 = scmp.ne.s32.totalorder %s88, %s91
      %p100 = scmp.eq.s32.totalorder %s17, 1
      %p101 = por %p99, %p100
      %p102 = scmp.ne.s32.totalorder %s91, %s92
      %p103 = scmp.eq.s32.totalorder %s17, 0
      %p104 = por %p102, %p103
      %p105 = scmp.ne.s32.totalorder %s91, %s92
      %p106 = scmp.eq.s32.totalorder %s18, 1
      %p107 = por %p105, %p106
      %p109 = scmp.ne.s32.totalorder %s92, %s108
      %p110 = scmp.eq.s32.totalorder %s18, 0
      %p111 = por %p109, %p110
      %s112 = ssub.s32 %s19, %s31
      %s113 = ssub.s32 %s20, %s27
      %s114 = sor.u32 %s112, %s113
      %p115 = scmp.eq.s32.totalorder %s114, 0
      %s117 = sadd.s32 %s116, 1
      %s118 = scalar_select %p115, %s116, %s117
      %p121 = pneg %p115
      %p122 = scmp.eq.s32.totalorder %s12, 1
      %p123 = por %p121, %p122
      %p124 = scmp.ne.s32.totalorder %s116, %s119
      %p125 = scmp.eq.s32.totalorder %s12, 0
      %p126 = por %p124, %p125
      %p127 = scmp.ne.s32.totalorder %s116, %s119
      %p128 = scmp.eq.s32.totalorder %s17, 1
      %p129 = por %p127, %p128
      %p130 = scmp.ne.s32.totalorder %s119, %s120
      %p131 = scmp.eq.s32.totalorder %s17, 0
      %p132 = por %p130, %p131
      %p133 = scmp.ne.s32.totalorder %s119, %s120
      %p134 = scmp.eq.s32.totalorder %s18, 1
      %p135 = por %p133, %p134
      %p137 = scmp.ne.s32.totalorder %s120, %s136
      %p138 = scmp.eq.s32.totalorder %s18, 0
      %p139 = por %p137, %p138
      %p140 = scmp.le.s32.totalorder 1, %s12
      %p141 = scmp.lt.s32.totalorder %s12, 3
      %p142 = pnand %p140, %p141
      %p143 = pneg %p142
      // Predicated region
      $region9: #{tpu_custom_call.1} parent=5 // pred_check
        _
      $region10: #{tpu_custom_call.1} parent=5 // pred_check_branch
        %145 = sbr.rel (%p142) target = $region12
      $region11: #{tpu_custom_call.1} parent=5 // pred_region
        %s146 = ssub.s32 %s12, 1
      $region12: #{tpu_custom_call.1} parent=5 // pred_fallthru
        _
      %p147 = scmp.lt.s32.totalorder %s12, 2
      // Predicated region
      $region13: #{tpu_custom_call.1} parent=5 // pred_check
        %p148 = pneg %p147
      $region14: #{tpu_custom_call.1} parent=5 // pred_check_branch
        %150 = sbr.rel (%p148) target = $region16
      $region15: #{tpu_custom_call.1} parent=5 // pred_region
        // Predicated region
        $region17: #{tpu_custom_call.1} parent=15 // pred_check
          %p151 = pneg %p44
        $region18: #{tpu_custom_call.1} parent=15 // pred_check_branch
          %153 = sbr.rel (%p151) target = $region20
        $region19: #{tpu_custom_call.1} parent=15 // pred_region
          %s154 = smul.u32 4, %s19
          %p155 = scmp.lt.s32.totalorder %s154, 7
          %s156 = scalar_select %p155, %s154, 7
          %s157 = smul.addr %s156, 8
          %s158 = scalar_lea.vmem %s0, %s157
          %s159 = smul.u32 4, %s19
        $region20: #{tpu_custom_call.1} parent=15 // pred_fallthru
          _
        // Predicated region
        $region21: #{tpu_custom_call.1} parent=15 // pred_check
          %p160 = pneg %p70
        $region22: #{tpu_custom_call.1} parent=15 // pred_check_branch
          %162 = sbr.rel (%p160) target = $region24
        $region23: #{tpu_custom_call.1} parent=15 // pred_region
          %s163 = smul.u32 4, %s19
          %p164 = scmp.lt.s32.totalorder %s163, 7
          %s165 = scalar_select %p164, %s163, 7
          %s166 = smul.addr %s165, 8
          %s167 = scalar_lea.vmem %s1, %s166
          %s168 = smul.u32 4, %s19
        $region24: #{tpu_custom_call.1} parent=15 // pred_fallthru
          _
        // Predicated region
        $region25: #{tpu_custom_call.1} parent=15 // pred_check
          %p169 = pneg %p98
        $region26: #{tpu_custom_call.1} parent=15 // pred_check_branch
          %171 = sbr.rel (%p169) target = $region28
        $region27: #{tpu_custom_call.1} parent=15 // pred_region
          %p172 = scmp.lt.s32.totalorder %s19, 1
          %s173 = scalar_select %p172, %s19, 1
          %p174 = scmp.lt.s32.totalorder %s20, 0
          %s175 = scalar_select %p174, %s20, 0
          %s176 = sadd.s32 %s175, %s173
          %s177 = smul.addr %s176, 8
          %s178 = scalar_lea.vmem %s2, %s177
        $region28: #{tpu_custom_call.1} parent=15 // pred_fallthru
          _
      $region16: #{tpu_custom_call.1} parent=5 // pred_fallthru
        _
      %p179 = scmp.le.s32.totalorder 1, %s12
      %p180 = scmp.lt.s32.totalorder %s12, 3
      %p181 = pnand %p179, %p180
      %p182 = pneg %p181
      // Predicated region
      $region29: #{tpu_custom_call.1} parent=5 // pred_check
        _
      $region30: #{tpu_custom_call.1} parent=5 // pred_check_branch
        %184 = sbr.rel (%p181) target = $region32
      $region31: #{tpu_custom_call.1} parent=5 // pred_region
        %s185 = ssub.s32 %s12, 1
        %s186 = smul.u32 4, %s21
        %p187 = scmp.lt.s32.totalorder %s186, 7
        %s188 = scalar_select %p187, %s186, 7
        %s189 = smul.addr %s188, 8
        %s190 = scalar_lea.vmem %s0, %s189
        %p191 = pneg %p50
        %p192 = pneg %p47
        %s193 = smul.u32 4, %s21
        %p194 = scmp.lt.s32.totalorder %s193, 7
        %s195 = scalar_select %p194, %s193, 7
        %s196 = smul.addr %s195, 8
        %s197 = scalar_lea.vmem %s1, %s196
        %p198 = pneg %p76
        %p199 = pneg %p73
        %p200 = scmp.lt.s32.totalorder %s21, 1
        %s201 = scalar_select %p200, %s21, 1
        %p202 = scmp.lt.s32.totalorder %s22, 0
        %s203 = scalar_select %p202, %s22, 0
        %s204 = sadd.s32 %s203, %s201
        %s205 = smul.addr %s204, 8
        %s206 = scalar_lea.vmem %s2, %s205
        %p207 = pneg %p104
        %p208 = pneg %p101
        %p209 = pneg %p132
        %p210 = pneg %p129
        %s211 = sand.u32 %s119, 1
        %s212 = scalar_lea.sflag [#allocation3], %s211
        %s213 = sand.u32 %s119, 1
        %s214 = smul.addr %s213, 16
        %s215 = scalar_lea.vmem [#allocation2], %s214
        %s216 = smul.u32 4, %s21
        %p217 = scmp.lt.s32.totalorder %s216, 7
        %s218 = scalar_select %p217, %s216, 7
        %s219 = smul.addr %s218, 8
        %s220 = scalar_lea.vmem %s0, %s219
        %s221 = smul.u32 4, %s21
        %s222 = smul.u32 4, %s21
        %p223 = scmp.lt.s32.totalorder %s222, 7
        %s224 = scalar_select %p223, %s222, 7
        %s225 = smul.addr %s224, 8
        %s226 = scalar_lea.vmem %s1, %s225
        %s227 = smul.u32 4, %s21
        %p228 = scmp.lt.s32.totalorder %s21, 1
        %s229 = scalar_select %p228, %s21, 1
        %p230 = scmp.lt.s32.totalorder %s22, 0
        %s231 = scalar_select %p230, %s22, 0
        %s232 = sadd.s32 %s231, %s229
        %s233 = smul.addr %s232, 8
        %s234 = scalar_lea.vmem %s2, %s233
        %s235 = smul.u32 4, %s21
        %v236 = vld [vmem:[%s220] sm:$0xff]
        %v237 = vld [vmem:[%s220 + $0x8] sm:$0xff]
        %v238 = vld [vmem:[%s220 + $0x10] sm:$0xff]
        %v239 = vld [vmem:[%s220 + $0x18] sm:$0xff]
        %v240 = vld [vmem:[%s226] sm:$0xff]
        %v241 = vld [vmem:[%s226 + $0x8] sm:$0xff]
        %v242 = vld [vmem:[%s226 + $0x10] sm:$0xff]
        %v243 = vld [vmem:[%s226 + $0x18] sm:$0xff]
        %v244 = vld [vmem:[%s234] sm:$0xff]
        %v245 = vunpack.c.0.s8 %v244
        %v246 = vunpack.c.1.s8 %v244
        %v247 = vunpack.c.2.s8 %v244
        %v248 = vunpack.c.3.s8 %v244
        %v249 = vand.u32 %v245, 255
        %v250 = vand.u32 %v246, 255
        %v251 = vand.u32 %v247, 255
        %v252 = vand.u32 %v248, 255
        %v253 = vcvt.s32.f32 %v249
        %v254 = vcvt.s32.f32 %v250
        %v255 = vcvt.s32.f32 %v251
        %v256 = vcvt.s32.f32 %v252
        %258 = vset.pattern.permute.xlu0 0
        %259 = vperm.xlu0 %258, %v236
        %v260 = vpop.permute.xlu0 %259
        %263 = vset.pattern.permute.xlu0 0
        %264 = vperm.xlu0 %263, %v237
        %v265 = vpop.permute.xlu0 %264
        %268 = vset.pattern.permute.xlu0 0
        %269 = vperm.xlu0 %268, %v238
        %v270 = vpop.permute.xlu0 %269
        %273 = vset.pattern.permute.xlu0 0
        %274 = vperm.xlu0 %273, %v239
        %v275 = vpop.permute.xlu0 %274
        %v277 = vmul.f32 %v253, %v260
        %v278 = vmul.f32 %v254, %v265
        %v279 = vmul.f32 %v255, %v270
        %v280 = vmul.f32 %v256, %v275
        %282 = vset.pattern.permute.xlu0 0
        %283 = vperm.xlu0 %282, %v240
        %v284 = vpop.permute.xlu0 %283
        %287 = vset.pattern.permute.xlu0 0
        %288 = vperm.xlu0 %287, %v241
        %v289 = vpop.permute.xlu0 %288
        %292 = vset.pattern.permute.xlu0 0
        %293 = vperm.xlu0 %292, %v242
        %v294 = vpop.permute.xlu0 %293
        %297 = vset.pattern.permute.xlu0 0
        %298 = vperm.xlu0 %297, %v243
        %v299 = vpop.permute.xlu0 %298
        %v301 = vadd.f32 %v277, %v284
        %v302 = vadd.f32 %v278, %v289
        %v303 = vadd.f32 %v279, %v294
        %v304 = vadd.f32 %v280, %v299
        %v305 = vpack.c.bf16 %v302, %v301
        %v306 = vpack.c.bf16 %v304, %v303
        %v309 = vunpack.c.l.b16 %v305
        %v310 = vunpack.c.h.b16 %v305
        %v311 = vunpack.c.l.b16 %v306
        %v312 = vunpack.c.h.b16 %v306
        %v313 = vpack.c.b16 %v309, %v309
        %v314 = vpack.c.b16 %v310, %v310
        %v315 = vpack.c.b16 %v311, %v311
        %v316 = vpack.c.b16 %v312, %v312
        %321 = vst [vmem:[%s215] sm:$0xf] %v313
        %322 = vst [vmem:[%s215 + $0x4] sm:$0xf] %v314
        %323 = vst [vmem:[%s215 + $0x8] sm:$0xf] %v315
        %324 = vst [vmem:[%s215 + $0xc] sm:$0xf] %v316
        %s325 = sand.u32 %s119, 1
        %s326 = scalar_lea.sflag [#allocation3], %s325
        %s327 = sand.u32 %s119, 1
        %s328 = smul.addr %s327, 16
        %s329 = scalar_lea.vmem [#allocation2], %s328
        // Predicated region
        $region33: #{tpu_custom_call.1} parent=31 // pred_check
          %p330 = pneg %p129
        $region34: #{tpu_custom_call.1} parent=31 // pred_check_branch
          %332 = sbr.rel (%p330) target = $region36
        $region35: #{tpu_custom_call.1} parent=31 // pred_region
          %s333 = smul.u32 4, %s21
          %s335 = ssub.s32 256, 256
          %336 = vsyncadd %s326, %s335
          %s337 = sadd.s32 %s22, %s333
          %s338 = smul.addr %s337, 64
          %s339 = scalar_lea.hbm %s3, %s338
          %s340 = sshll.u32 %s329, 4
          %s341 = int_to_ptr.vmem [resolvable:$true] %s340
          %346 = dma.vmem_to_hbm [thread:$0]  %s341, 256, %s339, %s326, 64, 64, 4
        $region36: #{tpu_custom_call.1} parent=31 // pred_fallthru
          _
      $region32: #{tpu_custom_call.1} parent=5 // pred_fallthru
        _
      %p347 = scmp.le.s32.totalorder 2, %s12
      // Predicated region
      $region37: #{tpu_custom_call.1} parent=5 // pred_check
        %p348 = pneg %p347
      $region38: #{tpu_custom_call.1} parent=5 // pred_check_branch
        %350 = sbr.rel (%p348) target = $region40
      $region39: #{tpu_custom_call.1} parent=5 // pred_region
        %s351 = ssub.s32 %s12, 2
        // Predicated region
        $region41: #{tpu_custom_call.1} parent=39 // pred_check
          %p352 = pneg %p135
        $region42: #{tpu_custom_call.1} parent=39 // pred_check_branch
          %354 = sbr.rel (%p352) target = $region44
        $region43: #{tpu_custom_call.1} parent=39 // pred_region
          %s355 = sand.u32 %s120, 1
          %s356 = scalar_lea.sflag [#allocation3], %s355
          %s357 = sand.u32 %s120, 1
          %s358 = smul.addr %s357, 16
          %s359 = scalar_lea.vmem [#allocation2], %s358
          %360 = dma.done %s356, 256
        $region44: #{tpu_custom_call.1} parent=39 // pred_fallthru
          _
      $region40: #{tpu_custom_call.1} parent=5 // pred_fallthru
        _
    $region6: #{tpu_custom_call.1} parent=1 // loop_footer
      %s16 = sadd.s32 1, %s12
    $region7: #{tpu_custom_call.1} parent=1 // loop_footer_branch
      %11 = sbr.rel target = $region3
    $region8: #{tpu_custom_call.1} parent=1 // loop_exit
      _
    %361 = vsyncpa [#allocation3], 1
    %s362 = scalar_lea.sflag [#allocation3], 1
    %363 = vsyncpa %s362, 1

</llo_original>
